<compile_context>
chip_gen: v7x
topology: tpu7x:2x2x1
jax: 0.10.0
libtpu: 0.0.40
codegen_flags: <defaults>
</compile_context>

<pallas_src>
import jax
import jax.numpy as jnp
from jax.experimental import pallas as pl
from jax.experimental.pallas import tpu as pltpu


def _round_up(x, m):
    return ((x + m - 1) // m) * m


def _cdiv(a, b):
    return -(-a // b)


def _choose_tiling(batch, max_tile=512):
    """Pick (tile_b, padded_batch). >=2 tiles when B > 16 (v7x megacore)."""
    min_tiles = 2 if batch > 16 else 1
    n_tiles = max(min_tiles, _cdiv(batch, max_tile))
    tile_b = _round_up(_cdiv(batch, n_tiles), 16)   # 16: bf16 sublane packing
    return tile_b, tile_b * n_tiles


def _disc_kernel(x_ref, w1_ref, b1_ref, w2_ref, b2_ref, w3_ref, b3_ref, o_ref):
    """One batch tile: Linear(64,512)+LeakyReLU, Linear(512,256)+LeakyReLU,
    Linear(256,1)+Sigmoid. Weights are VMEM-resident (constant index_map)."""
    wdt = w1_ref.dtype                       # matmul operand dtype (bf16 or f32)

    x = x_ref[...].astype(wdt)               # (TILE_B, 64)

    # Layer 1: MXU dot, f32 accumulation.
    h1 = jnp.dot(x, w1_ref[...], preferred_element_type=jnp.float32) + b1_ref[...]
    h1 = jnp.where(h1 > 0, h1, 0.02 * h1)    # LeakyReLU(0.02) in f32 on the VPU

    # Layer 2: MXU dot, f32 accumulation.
    h2 = (jnp.dot(h1.astype(wdt), w2_ref[...], preferred_element_type=jnp.float32)
          + b2_ref[...])
    h2 = jnp.where(h2 > 0, h2, 0.02 * h2)    # LeakyReLU(0.02)

    # Layer 3 (256 -> 1): VPU multiply + cross-lane (XLU) reduce against the
    # single weight row; MXU stays dedicated to layers 1-2.
    h3 = jnp.sum(h2 * w3_ref[...], axis=-1, keepdims=True) + b3_ref[...]  # (TILE_B,1)

    # Exact sigmoid, only on the one real column per row.
    o_ref[...] = 1.0 / (1.0 + jnp.exp(-h3))


def prepare_params(params, *, use_bf16=True):
    """One-time param prep: cast matmul weights (optionally to bf16), keep
    biases f32, turn w3 (256,1) into a (1,256) row for the VPU reduce."""
    w1, b1, w2, b2, w3, b3 = params
    wdt = jnp.bfloat16 if use_bf16 else jnp.float32
    return (w1.astype(wdt), b1.astype(jnp.float32),
            w2.astype(wdt), b2.astype(jnp.float32),
            w3.reshape(1, -1).astype(jnp.float32),     # (1, 256) f32 row
            b3.reshape(1, 1).astype(jnp.float32))      # (1, 1) f32


def discriminator_forward(img, features, prepared_params, *, max_tile=512):
    """img: (B, channels, time_steps) f32; features: (B, feature_dim) f32.
    Returns sigmoid scores of shape (B, 1)."""
    B = img.shape[0]
    # Fused flatten + concat in the wrapper: only B*4*d_in bytes of HBM.
    x = jnp.concatenate([img.reshape(B, -1), features], axis=1).astype(jnp.float32)
    d_in = x.shape[1]

    w1, b1, w2, b2, w3r, b3 = prepared_params
    assert w1.shape[0] == d_in, (w1.shape, d_in)

    tile_b, b_pad = _choose_tiling(B, max_tile)
    if b_pad != B:
        x = jnp.pad(x, ((0, b_pad - B), (0, 0)))

    rep = lambda a: pl.BlockSpec(a.shape, lambda i: (0, 0))   # resident weights

    out = pl.pallas_call(
        _disc_kernel,
        out_shape=jax.ShapeDtypeStruct((b_pad, 1), jnp.float32),
        grid=(b_pad // tile_b,),
        in_specs=[
            pl.BlockSpec((tile_b, d_in), lambda i: (i, 0)),   # activations
            rep(w1), rep(b1), rep(w2), rep(b2), rep(w3r), rep(b3),
        ],
        out_specs=pl.BlockSpec((tile_b, 1), lambda i: (i, 0)),
        compiler_params=pltpu.CompilerParams(
            dimension_semantics=("parallel",),   # shard batch tiles across TCs
            vmem_limit_bytes=32 << 20,           # footprint << 4 MiB; headroom kept
        ),
    )(x, w1, b1, w2, b2, w3r, b3)

    return out[:B]                               # (B, 1)


def init_params(key, d_in):
    """Xavier-normal weights / zero biases (matches initialize_weights)."""
    dims = [(d_in, 512), (512, 256), (256, 1)]
    params = []
    for fan_in, fan_out in dims:
        key, sub = jax.random.split(key)
        std = (2.0 / (fan_in + fan_out)) ** 0.5
        w = std * jax.random.normal(sub, (fan_in, fan_out), dtype=jnp.float32)
        b = jnp.zeros((1, fan_out), dtype=jnp.float32)
        params.extend([w, b])
    return tuple(params)


def _reference(img, features, params):
    """Pure-JAX reference (high-precision matmuls, exact sigmoid)."""
    w1, b1, w2, b2, w3, b3 = params
    x = jnp.concatenate([img.reshape(img.shape[0], -1), features], axis=1)
    h = jnp.dot(x, w1, precision="highest") + b1
    h = jnp.where(h > 0, h, 0.02 * h)
    h = jnp.dot(h, w2, precision="highest") + b2
    h = jnp.where(h > 0, h, 0.02 * h)
    return jax.nn.sigmoid(jnp.dot(h, w3, precision="highest") + b3)


if __name__ == "__main__":
    channels, time_steps, feature_dim = 4, 8, 32
    d_in = channels * time_steps + feature_dim   # 64

    key = jax.random.PRNGKey(0)
    k_img, k_feat, k_par, k_img2, k_feat2 = jax.random.split(key, 5)
    params = init_params(k_par, d_in)

    prepared_f32 = prepare_params(params, use_bf16=False)    # correctness path
    prepared_bf16 = prepare_params(params, use_bf16=True)    # fast (MXU bf16) path

    # Small case (B=2): single 16-row tile, padded batch.
    img = jax.random.normal(k_img, (2, channels, time_steps), dtype=jnp.float32)
    feats = jax.random.normal(k_feat, (2, feature_dim), dtype=jnp.float32)
    ref = _reference(img, feats, params)
    out = jax.block_until_ready(discriminator_forward(img, feats, prepared_f32))
    assert out.shape == (2, 1)
    assert jnp.allclose(out, ref, atol=5e-3, rtol=5e-3)

    # Larger case (B=300): adaptive 2x160-row tiles, multi-step grid + padding.
    img2 = jax.random.normal(k_img2, (300, channels, time_steps), dtype=jnp.float32)
    feats2 = jax.random.normal(k_feat2, (300, feature_dim), dtype=jnp.float32)
    ref2 = _reference(img2, feats2, params)

    out2 = jax.block_until_ready(discriminator_forward(img2, feats2, prepared_f32))
    assert out2.shape == (300, 1)
    assert jnp.allclose(out2, ref2, atol=5e-3, rtol=5e-3)

    # Hot path: bf16 matmul operands, f32 accumulation (looser tolerance vs f32 ref).
    out3 = jax.block_until_ready(discriminator_forward(img2, feats2, prepared_bf16))
    assert out3.shape == (300, 1)
    assert jnp.allclose(out3, ref2, atol=2e-2, rtol=2e-2)

    print("KERNEL_OK")
</pallas_src>

<mosaic_0001>
module attributes {stable_mosaic.version = 11 : i64} {
  func.func @_disc_kernel(%arg0: i32, %arg1: memref<16x64xf32, #tpu.memory_space<vmem>>, %arg2: memref<64x512xf32, #tpu.memory_space<vmem>>, %arg3: memref<1x512xf32, #tpu.memory_space<vmem>>, %arg4: memref<512x256xf32, #tpu.memory_space<vmem>>, %arg5: memref<1x256xf32, #tpu.memory_space<vmem>>, %arg6: memref<1x256xf32, #tpu.memory_space<vmem>>, %arg7: memref<1x1xf32, #tpu.memory_space<vmem>>, %arg8: memref<16x1xf32, #tpu.memory_space<vmem>>) attributes {dimension_semantics = [#tpu.dimension_semantics<parallel>], iteration_bounds = array<i64: 1>, scalar_prefetch = 0 : i64, scratch_operands = 0 : i64, tpu.core_type = #tpu.core_type<tc>, window_params = [{transform_indices = @transform_0, window_bounds = array<i64: 16, 64>}, {pipeline_mode = #tpu.pipeline_mode<synchronous>, transform_indices = @transform_1, window_bounds = array<i64: 64, 512>}, {pipeline_mode = #tpu.pipeline_mode<synchronous>, transform_indices = @transform_2, window_bounds = array<i64: 1, 512>}, {pipeline_mode = #tpu.pipeline_mode<synchronous>, transform_indices = @transform_3, window_bounds = array<i64: 512, 256>}, {pipeline_mode = #tpu.pipeline_mode<synchronous>, transform_indices = @transform_4, window_bounds = array<i64: 1, 256>}, {pipeline_mode = #tpu.pipeline_mode<synchronous>, transform_indices = @transform_5, window_bounds = array<i64: 1, 256>}, {pipeline_mode = #tpu.pipeline_mode<synchronous>, transform_indices = @transform_6, window_bounds = array<i64: 1, 1>}, {transform_indices = @transform_7, window_bounds = array<i64: 16, 1>}]} {
    %c0 = arith.constant 0 : index
    %c0_0 = arith.constant 0 : index
    %0 = vector.load %arg1[%c0, %c0_0] : memref<16x64xf32, #tpu.memory_space<vmem>>, vector<16x64xf32>
    %c0_1 = arith.constant 0 : index
    %c0_2 = arith.constant 0 : index
    %1 = vector.load %arg2[%c0_1, %c0_2] : memref<64x512xf32, #tpu.memory_space<vmem>>, vector<64x512xf32>
    %cst = arith.constant dense<0.000000e+00> : vector<16x512xf32>
    %2 = tpu.matmul %0, %1, %cst {dimension_numbers = #tpu.dot_dimension_numbers<[1], [0], [0], [1], [0, 0, 1, 1], [], []>} : vector<16x64xf32>, vector<64x512xf32>, vector<16x512xf32> -> vector<16x512xf32>
    %c0_3 = arith.constant 0 : index
    %c0_4 = arith.constant 0 : index
    %3 = vector.load %arg3[%c0_3, %c0_4] : memref<1x512xf32, #tpu.memory_space<vmem>>, vector<1x512xf32>
    %4 = vector.broadcast %3 : vector<1x512xf32> to vector<16x512xf32>
    %5 = arith.addf %2, %4 : vector<16x512xf32>
    %cst_5 = arith.constant 0.000000e+00 : f32
    %6 = vector.broadcast %cst_5 : f32 to vector<16x512xf32>
    %7 = arith.cmpf ogt, %5, %6 : vector<16x512xf32>
    %cst_6 = arith.constant 2.000000e-02 : f32
    %8 = vector.broadcast %cst_6 : f32 to vector<16x512xf32>
    %9 = arith.mulf %8, %5 : vector<16x512xf32>
    %10 = arith.select %7, %5, %9 : vector<16x512xi1>, vector<16x512xf32>
    %c0_7 = arith.constant 0 : index
    %c0_8 = arith.constant 0 : index
    %11 = vector.load %arg4[%c0_7, %c0_8] : memref<512x256xf32, #tpu.memory_space<vmem>>, vector<512x256xf32>
    %cst_9 = arith.constant dense<0.000000e+00> : vector<16x256xf32>
    %12 = tpu.matmul %10, %11, %cst_9 {dimension_numbers = #tpu.dot_dimension_numbers<[1], [0], [0], [1], [0, 0, 1, 1], [], []>} : vector<16x512xf32>, vector<512x256xf32>, vector<16x256xf32> -> vector<16x256xf32>
    %c0_10 = arith.constant 0 : index
    %c0_11 = arith.constant 0 : index
    %13 = vector.load %arg5[%c0_10, %c0_11] : memref<1x256xf32, #tpu.memory_space<vmem>>, vector<1x256xf32>
    %14 = vector.broadcast %13 : vector<1x256xf32> to vector<16x256xf32>
    %15 = arith.addf %12, %14 : vector<16x256xf32>
    %cst_12 = arith.constant 0.000000e+00 : f32
    %16 = vector.broadcast %cst_12 : f32 to vector<16x256xf32>
    %17 = arith.cmpf ogt, %15, %16 : vector<16x256xf32>
    %cst_13 = arith.constant 2.000000e-02 : f32
    %18 = vector.broadcast %cst_13 : f32 to vector<16x256xf32>
    %19 = arith.mulf %18, %15 : vector<16x256xf32>
    %20 = arith.select %17, %15, %19 : vector<16x256xi1>, vector<16x256xf32>
    %c0_14 = arith.constant 0 : index
    %c0_15 = arith.constant 0 : index
    %21 = vector.load %arg6[%c0_14, %c0_15] : memref<1x256xf32, #tpu.memory_space<vmem>>, vector<1x256xf32>
    %22 = vector.broadcast %21 : vector<1x256xf32> to vector<16x256xf32>
    %23 = arith.mulf %20, %22 : vector<16x256xf32>
    %cst_16 = arith.constant dense<0.000000e+00> : vector<16xf32>
    %24 = vector.multi_reduction <add>, %23, %cst_16 [1] : vector<16x256xf32> to vector<16xf32>
    %25 = vector.shape_cast %24 : vector<16xf32> to vector<16x1xf32>
    %c0_17 = arith.constant 0 : index
    %c0_18 = arith.constant 0 : index
    %26 = vector.load %arg7[%c0_17, %c0_18] : memref<1x1xf32, #tpu.memory_space<vmem>>, vector<1x1xf32>
    %27 = vector.broadcast %26 : vector<1x1xf32> to vector<16x1xf32>
    %28 = arith.addf %25, %27 : vector<16x1xf32>
    %cst_19 = arith.constant 0.000000e+00 : f32
    %29 = vector.broadcast %cst_19 : f32 to vector<16x1xf32>
    %30 = arith.subf %29, %28 : vector<16x1xf32>
    %31 = math.exp %30 : vector<16x1xf32>
    %cst_20 = arith.constant 1.000000e+00 : f32
    %32 = vector.broadcast %cst_20 : f32 to vector<16x1xf32>
    %33 = arith.addf %32, %31 : vector<16x1xf32>
    %cst_21 = arith.constant 1.000000e+00 : f32
    %34 = vector.broadcast %cst_21 : f32 to vector<16x1xf32>
    %35 = arith.divf %34, %33 : vector<16x1xf32>
    %c0_22 = arith.constant 0 : index
    %c0_23 = arith.constant 0 : index
    %36 = vector.load %arg8[%c0_22, %c0_23] : memref<16x1xf32, #tpu.memory_space<vmem>>, vector<16x1xf32>
    tpu.vector_store %arg8[%c0_22, %c0_23], %35 {strides = array<i32>} : memref<16x1xf32, #tpu.memory_space<vmem>>, vector<16x1xf32>,
    return
  }
  func.func @transform_0(%arg0: i32) -> (i32, i32) {
    %c0_i32 = arith.constant 0 : i32
    %c0_i32_0 = arith.constant 0 : i32
    return %arg0, %c0_i32 : i32, i32
  }
  func.func @transform_1(%arg0: i32) -> (i32, i32) {
    %c0_i32 = arith.constant 0 : i32
    %c0_i32_0 = arith.constant 0 : i32
    %c0_i32_1 = arith.constant 0 : i32
    return %c0_i32, %c0_i32_0 : i32, i32
  }
  func.func @transform_2(%arg0: i32) -> (i32, i32) {
    %c0_i32 = arith.constant 0 : i32
    %c0_i32_0 = arith.constant 0 : i32
    %c0_i32_1 = arith.constant 0 : i32
    return %c0_i32, %c0_i32_0 : i32, i32
  }
  func.func @transform_3(%arg0: i32) -> (i32, i32) {
    %c0_i32 = arith.constant 0 : i32
    %c0_i32_0 = arith.constant 0 : i32
    %c0_i32_1 = arith.constant 0 : i32
    return %c0_i32, %c0_i32_0 : i32, i32
  }
  func.func @transform_4(%arg0: i32) -> (i32, i32) {
    %c0_i32 = arith.constant 0 : i32
    %c0_i32_0 = arith.constant 0 : i32
    %c0_i32_1 = arith.constant 0 : i32
    return %c0_i32, %c0_i32_0 : i32, i32
  }
  func.func @transform_5(%arg0: i32) -> (i32, i32) {
    %c0_i32 = arith.constant 0 : i32
    %c0_i32_0 = arith.constant 0 : i32
    %c0_i32_1 = arith.constant 0 : i32
    return %c0_i32, %c0_i32_0 : i32, i32
  }
  func.func @transform_6(%arg0: i32) -> (i32, i32) {
    %c0_i32 = arith.constant 0 : i32
    %c0_i32_0 = arith.constant 0 : i32
    %c0_i32_1 = arith.constant 0 : i32
    return %c0_i32, %c0_i32_0 : i32, i32
  }
  func.func @transform_7(%arg0: i32) -> (i32, i32) {
    %c0_i32 = arith.constant 0 : i32
    %c0_i32_0 = arith.constant 0 : i32
    return %arg0, %c0_i32 : i32, i32
  }
}

</mosaic_0001>

<llo_original>
// kernel: tpu_custom_call.1
$region0: #{tpu_custom_call.1}
  #allocation0 [shape = 'u32[]', space=smem, size = 0x4, offset = 0x4, fixed_abs, tag = 'smem constant byte address 0x4 - core index']
  #allocation1 [shape = 'u32[144,128]{1,0:T(1,128)}', space=vmem, size = 0x12000, scoped, tag = 'internal scratch']
  #allocation2 [shape = 'f32[1,1]{1,0:T(1,128)S(1)}', space=vmem, size = 0x200, scoped, tag = 'scoped memory for tpu_custom_call.1']
  %s0 = inlined_call_operand.hbm [shape: f32[16,64], index: 0, kind: input, shape index: {}]
  %s1 = inlined_call_operand.hbm [shape: f32[64,512], index: 1, kind: input, shape index: {}]
  %s2 = inlined_call_operand.vmem [shape: f32[1,512], index: 2, kind: input, shape index: {}]
  %s3 = inlined_call_operand.hbm [shape: f32[512,256], index: 3, kind: input, shape index: {}]
  %s4 = inlined_call_operand.vmem [shape: f32[1,256], index: 4, kind: input, shape index: {}]
  %s5 = inlined_call_operand.vmem [shape: f32[1,256], index: 5, kind: input, shape index: {}]
  %s6 = inlined_call_operand.<no memory space> [shape: f32[1,1], index: 6, kind: input, shape index: {}]
  %s7 = inlined_call_operand.vmem [shape: f32[16,1], index: 7, kind: output, shape index: {}]
  %s8 = sld [smem:[#allocation0]]
  $region50: #{tpu_custom_call.1} parent=0
    _
  %s10 = ssub.s32 1, %s8
  %s11 = scalar_select 0, %s10, %s8
  %v12 = vstv %s6
  %13 = vst [vmem:[#allocation2] sm:$0x1] %v12
  $region1: #{tpu_custom_call.1} parent=0
    #allocation3 [shape = 'u8[8192]{0}', space=vmem, size = 0x2000, scoped, tag = 'input window, operand 0, single buffered']
    #allocation4 [shape = 's32[1]{0}', space=sflag, size = 0x4, scoped, tag = 'scoped memory for tpu_custom_call.1']
    #allocation5 [shape = 'u8[131072]{0}', space=vmem, size = 0x20000, scoped, tag = 'input window, operand 1, single buffered']
    #allocation6 [shape = 's32[1]{0}', space=sflag, size = 0x4, scoped, tag = 'scoped memory for tpu_custom_call.1']
    #allocation7 [shape = 'u8[524288]{0}', space=vmem, size = 0x80000, scoped, tag = 'input window, operand 3, single buffered']
    %14 = vsyncpa [#allocation4], 0
    %15 = vsyncpa [#allocation6], 0
    // Predicated region
    $region2: #{tpu_custom_call.1} parent=1 // pred_check
      _
    $region3: #{tpu_custom_call.1} parent=1 // pred_check_branch
      %17 = sbr.rel (0) target = $region5
    $region4: #{tpu_custom_call.1} parent=1 // pred_region
      %s19 = ssub.s32 256, 256
      %20 = vsyncadd [#allocation4], %s19
      %s21 = sshll.u32 [#allocation3], 4
      %s22 = int_to_ptr.vmem [resolvable:$true] %s21
      %27 = dma.hbm_to_vmem [thread:$0]  %s0, 256, %s22, [#allocation4], 128, 128, 8
    $region5: #{tpu_custom_call.1} parent=1 // pred_fallthru
      _
    // Predicated region
    $region6: #{tpu_custom_call.1} parent=1 // pred_check
      _
    $region7: #{tpu_custom_call.1} parent=1 // pred_check_branch
      %29 = sbr.rel (0) target = $region9
    $region8: #{tpu_custom_call.1} parent=1 // pred_region
      %s31 = ssub.s32 4096, 4096
      %32 = vsyncadd [#allocation6], %s31
      %s33 = sshll.u32 [#allocation5], 4
      %s34 = int_to_ptr.vmem [resolvable:$true] %s33
      %39 = dma.hbm_to_vmem [thread:$0]  %s1, 4096, %s34, [#allocation6], 512, 512, 32
    $region9: #{tpu_custom_call.1} parent=1 // pred_fallthru
      _
    // Predicated region
    $region10: #{tpu_custom_call.1} parent=1 // pred_check
      _
    $region11: #{tpu_custom_call.1} parent=1 // pred_check_branch
      %41 = sbr.rel (0) target = $region13
    $region12: #{tpu_custom_call.1} parent=1 // pred_region
      _
    $region13: #{tpu_custom_call.1} parent=1 // pred_fallthru
      _
    // Predicated region
    $region14: #{tpu_custom_call.1} parent=1 // pred_check
      _
    $region15: #{tpu_custom_call.1} parent=1 // pred_check_branch
      %43 = sbr.rel (0) target = $region17
    $region16: #{tpu_custom_call.1} parent=1 // pred_region
      %s45 = ssub.s32 16384, 16384
      %46 = vsyncadd [#allocation6], %s45
      %s47 = sshll.u32 [#allocation7], 4
      %s48 = int_to_ptr.vmem [resolvable:$true] %s47
      %53 = dma.hbm_to_vmem [thread:$0]  %s3, 16384, %s48, [#allocation6], 256, 256, 16
    $region17: #{tpu_custom_call.1} parent=1 // pred_fallthru
      _
    // Predicated region
    $region18: #{tpu_custom_call.1} parent=1 // pred_check
      _
    $region19: #{tpu_custom_call.1} parent=1 // pred_check_branch
      %55 = sbr.rel (0) target = $region21
    $region20: #{tpu_custom_call.1} parent=1 // pred_region
      _
    $region21: #{tpu_custom_call.1} parent=1 // pred_fallthru
      _
    // Predicated region
    $region22: #{tpu_custom_call.1} parent=1 // pred_check
      _
    $region23: #{tpu_custom_call.1} parent=1 // pred_check_branch
      %57 = sbr.rel (0) target = $region25
    $region24: #{tpu_custom_call.1} parent=1 // pred_region
      _
    $region25: #{tpu_custom_call.1} parent=1 // pred_fallthru
      _
    // Predicated region
    $region26: #{tpu_custom_call.1} parent=1 // pred_check
      _
    $region27: #{tpu_custom_call.1} parent=1 // pred_check_branch
      %59 = sbr.rel (0) target = $region29
    $region28: #{tpu_custom_call.1} parent=1 // pred_region
      _
    $region29: #{tpu_custom_call.1} parent=1 // pred_fallthru
      _
    // Predicated region
    $region30: #{tpu_custom_call.1} parent=1 // pred_check
      _
    $region31: #{tpu_custom_call.1} parent=1 // pred_check_branch
      %61 = sbr.rel (0) target = $region33
    $region32: #{tpu_custom_call.1} parent=1 // pred_region
      %62 = dma.done [#allocation4], 256
    $region33: #{tpu_custom_call.1} parent=1 // pred_fallthru
      _
    // Predicated region
    $region34: #{tpu_custom_call.1} parent=1 // pred_check
      _
    $region35: #{tpu_custom_call.1} parent=1 // pred_check_branch
      %64 = sbr.rel (0) target = $region37
    $region36: #{tpu_custom_call.1} parent=1 // pred_region
      %65 = dma.done [#allocation6], 4096
    $region37: #{tpu_custom_call.1} parent=1 // pred_fallthru
      _
    // Predicated region
    $region38: #{tpu_custom_call.1} parent=1 // pred_check
      _
    $region39: #{tpu_custom_call.1} parent=1 // pred_check_branch
      %67 = sbr.rel (0) target = $region41
    $region40: #{tpu_custom_call.1} parent=1 // pred_region
      %68 = dma.done [#allocation6], 16384
    $region41: #{tpu_custom_call.1} parent=1 // pred_fallthru
      _
    %v69 = vld [vmem:[#allocation3] sm:$0xff]
    %v70 = vld [vmem:[#allocation3 + $0x8] sm:$0xff]
    %v71 = vld [vmem:[#allocation5] sm:$0xff]
    %v72 = vld [vmem:[#allocation5 + $0x8] sm:$0xff]
    %v73 = vld [vmem:[#allocation5 + $0x10] sm:$0xff]
    %v74 = vld [vmem:[#allocation5 + $0x18] sm:$0xff]
    %v75 = vld [vmem:[#allocation5 + $0x20] sm:$0xff]
    %v76 = vld [vmem:[#allocation5 + $0x28] sm:$0xff]
    %v77 = vld [vmem:[#allocation5 + $0x30] sm:$0xff]
    %v78 = vld [vmem:[#allocation5 + $0x38] sm:$0xff]
    %v79 = vld [vmem:[#allocation5 + $0x40] sm:$0xff]
    %v80 = vld [vmem:[#allocation5 + $0x48] sm:$0xff]
    %v81 = vld [vmem:[#allocation5 + $0x50] sm:$0xff]
    %v82 = vld [vmem:[#allocation5 + $0x58] sm:$0xff]
    %v83 = vld [vmem:[#allocation5 + $0x60] sm:$0xff]
    %v84 = vld [vmem:[#allocation5 + $0x68] sm:$0xff]
    %v85 = vld [vmem:[#allocation5 + $0x70] sm:$0xff]
    %v86 = vld [vmem:[#allocation5 + $0x78] sm:$0xff]
    %v87 = vld [vmem:[#allocation5 + $0x80] sm:$0xff]
    %v88 = vld [vmem:[#allocation5 + $0x88] sm:$0xff]
    %v89 = vld [vmem:[#allocation5 + $0x90] sm:$0xff]
    %v90 = vld [vmem:[#allocation5 + $0x98] sm:$0xff]
    %v91 = vld [vmem:[#allocation5 + $0xa0] sm:$0xff]
    %v92 = vld [vmem:[#allocation5 + $0xa8] sm:$0xff]
    %v93 = vld [vmem:[#allocation5 + $0xb0] sm:$0xff]
    %v94 = vld [vmem:[#allocation5 + $0xb8] sm:$0xff]
    %v95 = vld [vmem:[#allocation5 + $0xc0] sm:$0xff]
    %v96 = vld [vmem:[#allocation5 + $0xc8] sm:$0xff]
    %v97 = vld [vmem:[#allocation5 + $0xd0] sm:$0xff]
    %v98 = vld [vmem:[#allocation5 + $0xd8] sm:$0xff]
    %v99 = vld [vmem:[#allocation5 + $0xe0] sm:$0xff]
    %v100 = vld [vmem:[#allocation5 + $0xe8] sm:$0xff]
    %v101 = vld [vmem:[#allocation5 + $0xf0] sm:$0xff]
    %v102 = vld [vmem:[#allocation5 + $0xf8] sm:$0xff]
    %v103 = vld [vmem:[%s2] sm:$0xf]
    %v105 = vlaneseq
    %v106 = vshrl.u32 %v105, 7
    %v107 = vsub.s32 0, %v106
    %v108 = vrot.slane %v103, %v107
    %v109 = vlaneseq
    %v110 = vshrl.u32 %v109, 7
    %v111 = vsub.s32 1, %v110
    %v112 = vrot.slane %v103, %v111
    %v113 = vlaneseq
    %v114 = vshrl.u32 %v113, 7
    %v115 = vsub.s32 2, %v114
    %v116 = vrot.slane %v103, %v115
    %v117 = vlaneseq
    %v118 = vshrl.u32 %v117, 7
    %v119 = vsub.s32 3, %v118
    %v120 = vrot.slane %v103, %v119
    %vm125 = vcmask 523264
    %v127 = vsel %vm125, %v69, 0
    %v130 = vsel %vm125, %v70, 0
    %132 = vmatprep.subr.mxu0 %v72
    %133 = vmatpush1.msra.mxu0 %v71
    %134 = vmatprep.subr.mxu0 %v76
    %135 = vmatpush1.msra.mxu0 %v75
    %136 = vmatprep.subr.mxu0 %v80
    %137 = vmatpush1.msra.mxu0 %v79
    %138 = vmatprep.subr.mxu0 %v84
    %139 = vmatpush1.msra.mxu0 %v83
    %140 = vmatprep.subr.mxu0 %v88
    %141 = vmatpush1.msra.mxu0 %v87
    %142 = vmatprep.subr.mxu0 %v92
    %143 = vmatpush1.msra.mxu0 %v91
    %144 = vmatprep.subr.mxu0 %v96
    %145 = vmatpush1.msra.mxu0 %v95
    %146 = vmatprep.subr.mxu0 %v100
    %147 = vmatpush1.msra.mxu0 %v99
    %148 = vmatprep.subr.mxu0 0.0
    %149 = vmatpush1.msra.mxu0 0.0
    %150 = vmatprep.subr.mxu0 0.0
    %151 = vmatpush1.msra.mxu0 0.0
    %152 = vmatprep.subr.mxu0 0.0
    %153 = vmatpush1.msra.mxu0 0.0
    %154 = vmatprep.subr.mxu0 0.0
    %155 = vmatpush1.msra.mxu0 0.0
    %156 = vmatprep.subr.mxu0 0.0
    %157 = vmatpush1.msra.mxu0 0.0
    %158 = vmatprep.subr.mxu0 0.0
    %159 = vmatpush1.msra.mxu0 0.0
    %160 = vmatprep.subr.mxu0 0.0
    %161 = vmatpush1.msra.mxu0 0.0
    %162 = vmatprep.subr.mxu0 0.0
    %163 = vmatpush1.msra.mxu0 0.0
    %164 = vmatprep.subr.mxu0 0.0
    %165 = vmatpush1.msra.mxu0 0.0
    %166 = vmatprep.subr.mxu0 0.0
    %167 = vmatpush1.msra.mxu0 0.0
    %168 = vmatprep.subr.mxu0 0.0
    %169 = vmatpush1.msra.mxu0 0.0
    %170 = vmatprep.subr.mxu0 0.0
    %171 = vmatpush1.msra.mxu0 0.0
    %172 = vmatprep.subr.mxu0 0.0
    %173 = vmatpush1.msra.mxu0 0.0
    %174 = vmatprep.subr.mxu0 0.0
    %175 = vmatpush1.msra.mxu0 0.0
    %176 = vmatprep.subr.mxu0 0.0
    %177 = vmatpush1.msra.mxu0 0.0
    %178 = vmatprep.subr.mxu0 0.0
    %179 = vmatpush1.msra.mxu0 0.0
    %180 = vmatprep.subr.mxu0 0.0
    %181 = vmatpush1.msra.mxu0 0.0
    %182 = vmatprep.subr.mxu0 0.0
    %183 = vmatpush1.msra.mxu0 0.0
    %184 = vmatprep.subr.mxu0 0.0
    %185 = vmatpush1.msra.mxu0 0.0
    %186 = vmatprep.subr.mxu0 0.0
    %187 = vmatpush1.msra.mxu0 0.0
    %188 = vmatprep.subr.mxu0 0.0
    %189 = vmatpush1.msra.mxu0 0.0
    %190 = vmatprep.subr.mxu0 0.0
    %191 = vmatpush1.msra.mxu0 0.0
    %192 = vmatprep.subr.mxu0 0.0
    %193 = vmatpush1.msra.mxu0 0.0
    %194 = vmatprep.subr.mxu0 0.0
    %195 = vmatpush1.msra.mxu0 0.0
    %196 = vmatprep.mubr.f32.mxu0 0.0
    %197 = vmatmul.mubr.f32.gmra.mrb[0].mxu0 %v127
    %v198 = vpop.f32.mrb[0].mxu0
    %v199 = vadd.f32 %v108, %v198
    %v200 = vpop.f32.mrb[0].mxu0
    %v201 = vadd.f32 %v112, %v200
    %202 = vmatprep.mubr.f32.mxu0 0.0
    %203 = vmatmul.mubr.f32.gmra.mrb[0].mxu0 %v130
    %v204 = vpop.f32.mrb[0].mxu0
    %v205 = vadd.f32 %v108, %v204
    %v206 = vpop.f32.mrb[0].mxu0
    %v207 = vadd.f32 %v112, %v206
    %208 = vdwg.mxu0
    %209 = vmatprep.subr.mxu0 %v74
    %210 = vmatpush1.msra.mxu0 %v73
    %211 = vmatprep.subr.mxu0 %v78
    %212 = vmatpush1.msra.mxu0 %v77
    %213 = vmatprep.subr.mxu0 %v82
    %214 = vmatpush1.msra.mxu0 %v81
    %215 = vmatprep.subr.mxu0 %v86
    %216 = vmatpush1.msra.mxu0 %v85
    %217 = vmatprep.subr.mxu0 %v90
    %218 = vmatpush1.msra.mxu0 %v89
    %219 = vmatprep.subr.mxu0 %v94
    %220 = vmatpush1.msra.mxu0 %v93
    %221 = vmatprep.subr.mxu0 %v98
    %222 = vmatpush1.msra.mxu0 %v97
    %223 = vmatprep.subr.mxu0 %v102
    %224 = vmatpush1.msra.mxu0 %v101
    %225 = vmatprep.subr.mxu0 0.0
    %226 = vmatpush1.msra.mxu0 0.0
    %227 = vmatprep.subr.mxu0 0.0
    %228 = vmatpush1.msra.mxu0 0.0
    %229 = vmatprep.subr.mxu0 0.0
    %230 = vmatpush1.msra.mxu0 0.0
    %231 = vmatprep.subr.mxu0 0.0
    %232 = vmatpush1.msra.mxu0 0.0
    %233 = vmatprep.subr.mxu0 0.0
    %234 = vmatpush1.msra.mxu0 0.0
    %235 = vmatprep.subr.mxu0 0.0
    %236 = vmatpush1.msra.mxu0 0.0
    %237 = vmatprep.subr.mxu0 0.0
    %238 = vmatpush1.msra.mxu0 0.0
    %239 = vmatprep.subr.mxu0 0.0
    %240 = vmatpush1.msra.mxu0 0.0
    %241 = vmatprep.subr.mxu0 0.0
    %242 = vmatpush1.msra.mxu0 0.0
    %243 = vmatprep.subr.mxu0 0.0
    %244 = vmatpush1.msra.mxu0 0.0
    %245 = vmatprep.subr.mxu0 0.0
    %246 = vmatpush1.msra.mxu0 0.0
    %247 = vmatprep.subr.mxu0 0.0
    %248 = vmatpush1.msra.mxu0 0.0
    %249 = vmatprep.subr.mxu0 0.0
    %250 = vmatpush1.msra.mxu0 0.0
    %251 = vmatprep.subr.mxu0 0.0
    %252 = vmatpush1.msra.mxu0 0.0
    %253 = vmatprep.subr.mxu0 0.0
    %254 = vmatpush1.msra.mxu0 0.0
    %255 = vmatprep.subr.mxu0 0.0
    %256 = vmatpush1.msra.mxu0 0.0
    %257 = vmatprep.subr.mxu0 0.0
    %258 = vmatpush1.msra.mxu0 0.0
    %259 = vmatprep.subr.mxu0 0.0
    %260 = vmatpush1.msra.mxu0 0.0
    %261 = vmatprep.subr.mxu0 0.0
    %262 = vmatpush1.msra.mxu0 0.0
    %263 = vmatprep.subr.mxu0 0.0
    %264 = vmatpush1.msra.mxu0 0.0
    %265 = vmatprep.subr.mxu0 0.0
    %266 = vmatpush1.msra.mxu0 0.0
    %267 = vmatprep.subr.mxu0 0.0
    %268 = vmatpush1.msra.mxu0 0.0
    %269 = vmatprep.subr.mxu0 0.0
    %270 = vmatpush1.msra.mxu0 0.0
    %271 = vmatprep.subr.mxu0 0.0
    %272 = vmatpush1.msra.mxu0 0.0
    %273 = vmatprep.mubr.f32.mxu0 0.0
    %274 = vmatmul.mubr.f32.gmra.mrb[0].mxu0 %v127
    %v275 = vpop.f32.mrb[0].mxu0
    %v276 = vadd.f32 %v116, %v275
    %v277 = vpop.f32.mrb[0].mxu0
    %v278 = vadd.f32 %v120, %v277
    %279 = vmatprep.mubr.f32.mxu0 0.0
    %280 = vmatmul.mubr.f32.gmra.mrb[0].mxu0 %v130
    %v281 = vpop.f32.mrb[0].mxu0
    %v282 = vadd.f32 %v116, %v281
    %v283 = vpop.f32.mrb[0].mxu0
    %v284 = vadd.f32 %v120, %v283
    %285 = vdwg.mxu0
    %vm286 = vcmp.gt.f32.partialorder %v199, 0.0
    %vm287 = vcmp.gt.f32.partialorder %v201, 0.0
    %vm288 = vcmp.gt.f32.partialorder %v276, 0.0
    %vm289 = vcmp.gt.f32.partialorder %v278, 0.0
    %vm290 = vcmp.gt.f32.partialorder %v205, 0.0
    %vm291 = vcmp.gt.f32.partialorder %v207, 0.0
    %vm292 = vcmp.gt.f32.partialorder %v282, 0.0
    %vm293 = vcmp.gt.f32.partialorder %v284, 0.0
    %v294 = vmul.f32 %v199, 0.02
    %v295 = vmul.f32 %v201, 0.02
    %v296 = vmul.f32 %v276, 0.02
    %v297 = vmul.f32 %v278, 0.02
    %v298 = vmul.f32 %v205, 0.02
    %v299 = vmul.f32 %v207, 0.02
    %v300 = vmul.f32 %v282, 0.02
    %v301 = vmul.f32 %v284, 0.02
    %v302 = vsel %vm286, %v199, %v294
    %v303 = vsel %vm287, %v201, %v295
    %v304 = vsel %vm288, %v276, %v296
    %v305 = vsel %vm289, %v278, %v297
    %v306 = vsel %vm290, %v205, %v298
    %v307 = vsel %vm291, %v207, %v299
    %v308 = vsel %vm292, %v282, %v300
    %v309 = vsel %vm293, %v284, %v301
    %v310 = vld [vmem:[#allocation7] sm:$0xff]
    %v311 = vld [vmem:[#allocation7 + $0x8] sm:$0xff]
    %v312 = vld [vmem:[#allocation7 + $0x10] sm:$0xff]
    %v313 = vld [vmem:[#allocation7 + $0x18] sm:$0xff]
    %v314 = vld [vmem:[#allocation7 + $0x20] sm:$0xff]
    %v315 = vld [vmem:[#allocation7 + $0x28] sm:$0xff]
    %v316 = vld [vmem:[#allocation7 + $0x30] sm:$0xff]
    %v317 = vld [vmem:[#allocation7 + $0x38] sm:$0xff]
    %v318 = vld [vmem:[#allocation7 + $0x40] sm:$0xff]
    %v319 = vld [vmem:[#allocation7 + $0x48] sm:$0xff]
    %v320 = vld [vmem:[#allocation7 + $0x50] sm:$0xff]
    %v321 = vld [vmem:[#allocation7 + $0x58] sm:$0xff]
    %v322 = vld [vmem:[#allocation7 + $0x60] sm:$0xff]
    %v323 = vld [vmem:[#allocation7 + $0x68] sm:$0xff]
    %v324 = vld [vmem:[#allocation7 + $0x70] sm:$0xff]
    %v325 = vld [vmem:[#allocation7 + $0x78] sm:$0xff]
    %v326 = vld [vmem:[#allocation7 + $0x80] sm:$0xff]
    %v327 = vld [vmem:[#allocation7 + $0x88] sm:$0xff]
    %v328 = vld [vmem:[#allocation7 + $0x90] sm:$0xff]
    %v329 = vld [vmem:[#allocation7 + $0x98] sm:$0xff]
    %v330 = vld [vmem:[#allocation7 + $0xa0] sm:$0xff]
    %v331 = vld [vmem:[#allocation7 + $0xa8] sm:$0xff]
    %v332 = vld [vmem:[#allocation7 + $0xb0] sm:$0xff]
    %v333 = vld [vmem:[#allocation7 + $0xb8] sm:$0xff]
    %v334 = vld [vmem:[#allocation7 + $0xc0] sm:$0xff]
    %v335 = vld [vmem:[#allocation7 + $0xc8] sm:$0xff]
    %v336 = vld [vmem:[#allocation7 + $0xd0] sm:$0xff]
    %v337 = vld [vmem:[#allocation7 + $0xd8] sm:$0xff]
    %v338 = vld [vmem:[#allocation7 + $0xe0] sm:$0xff]
    %v339 = vld [vmem:[#allocation7 + $0xe8] sm:$0xff]
    %v340 = vld [vmem:[#allocation7 + $0xf0] sm:$0xff]
    %v341 = vld [vmem:[#allocation7 + $0xf8] sm:$0xff]
    %v342 = vld [vmem:[#allocation7 + $0x100] sm:$0xff]
    %v343 = vld [vmem:[#allocation7 + $0x108] sm:$0xff]
    %v344 = vld [vmem:[#allocation7 + $0x110] sm:$0xff]
    %v345 = vld [vmem:[#allocation7 + $0x118] sm:$0xff]
    %v346 = vld [vmem:[#allocation7 + $0x120] sm:$0xff]
    %v347 = vld [vmem:[#allocation7 + $0x128] sm:$0xff]
    %v348 = vld [vmem:[#allocation7 + $0x130] sm:$0xff]
    %v349 = vld [vmem:[#allocation7 + $0x138] sm:$0xff]
    %v350 = vld [vmem:[#allocation7 + $0x140] sm:$0xff]
    %v351 = vld [vmem:[#allocation7 + $0x148] sm:$0xff]
    %v352 = vld [vmem:[#allocation7 + $0x150] sm:$0xff]
    %v353 = vld [vmem:[#allocation7 + $0x158] sm:$0xff]
    %v354 = vld [vmem:[#allocation7 + $0x160] sm:$0xff]
    %v355 = vld [vmem:[#allocation7 + $0x168] sm:$0xff]
    %v356 = vld [vmem:[#allocation7 + $0x170] sm:$0xff]
    %v357 = vld [vmem:[#allocation7 + $0x178] sm:$0xff]
    %v358 = vld [vmem:[#allocation7 + $0x180] sm:$0xff]
    %v359 = vld [vmem:[#allocation7 + $0x188] sm:$0xff]
    %v360 = vld [vmem:[#allocation7 + $0x190] sm:$0xff]
    %v361 = vld [vmem:[#allocation7 + $0x198] sm:$0xff]
    %v362 = vld [vmem:[#allocation7 + $0x1a0] sm:$0xff]
    %v363 = vld [vmem:[#allocation7 + $0x1a8] sm:$0xff]
    %v364 = vld [vmem:[#allocation7 + $0x1b0] sm:$0xff]
    %v365 = vld [vmem:[#allocation7 + $0x1b8] sm:$0xff]
    %v366 = vld [vmem:[#allocation7 + $0x1c0] sm:$0xff]
    %v367 = vld [vmem:[#allocation7 + $0x1c8] sm:$0xff]
    %v368 = vld [vmem:[#allocation7 + $0x1d0] sm:$0xff]
    %v369 = vld [vmem:[#allocation7 + $0x1d8] sm:$0xff]
    %v370 = vld [vmem:[#allocation7 + $0x1e0] sm:$0xff]
    %v371 = vld [vmem:[#allocation7 + $0x1e8] sm:$0xff]
    %v372 = vld [vmem:[#allocation7 + $0x1f0] sm:$0xff]
    %v373 = vld [vmem:[#allocation7 + $0x1f8] sm:$0xff]
    %v374 = vld [vmem:[#allocation7 + $0x200] sm:$0xff]
    %v375 = vld [vmem:[#allocation7 + $0x208] sm:$0xff]
    %v376 = vld [vmem:[#allocation7 + $0x210] sm:$0xff]
    %v377 = vld [vmem:[#allocation7 + $0x218] sm:$0xff]
    %v378 = vld [vmem:[#allocation7 + $0x220] sm:$0xff]
    %v379 = vld [vmem:[#allocation7 + $0x228] sm:$0xff]
    %v380 = vld [vmem:[#allocation7 + $0x230] sm:$0xff]
    %v381 = vld [vmem:[#allocation7 + $0x238] sm:$0xff]
    %v382 = vld [vmem:[#allocation7 + $0x240] sm:$0xff]
    %v383 = vld [vmem:[#allocation7 + $0x248] sm:$0xff]
    %v384 = vld [vmem:[#allocation7 + $0x250] sm:$0xff]
    %v385 = vld [vmem:[#allocation7 + $0x258] sm:$0xff]
    %v386 = vld [vmem:[#allocation7 + $0x260] sm:$0xff]
    %v387 = vld [vmem:[#allocation7 + $0x268] sm:$0xff]
    %v388 = vld [vmem:[#allocation7 + $0x270] sm:$0xff]
    %v389 = vld [vmem:[#allocation7 + $0x278] sm:$0xff]
    %v390 = vld [vmem:[#allocation7 + $0x280] sm:$0xff]
    %v391 = vld [vmem:[#allocation7 + $0x288] sm:$0xff]
    %v392 = vld [vmem:[#allocation7 + $0x290] sm:$0xff]
    %v393 = vld [vmem:[#allocation7 + $0x298] sm:$0xff]
    %v394 = vld [vmem:[#allocation7 + $0x2a0] sm:$0xff]
    %v395 = vld [vmem:[#allocation7 + $0x2a8] sm:$0xff]
    %v396 = vld [vmem:[#allocation7 + $0x2b0] sm:$0xff]
    %v397 = vld [vmem:[#allocation7 + $0x2b8] sm:$0xff]
    %v398 = vld [vmem:[#allocation7 + $0x2c0] sm:$0xff]
    %v399 = vld [vmem:[#allocation7 + $0x2c8] sm:$0xff]
    %v400 = vld [vmem:[#allocation7 + $0x2d0] sm:$0xff]
    %v401 = vld [vmem:[#allocation7 + $0x2d8] sm:$0xff]
    %v402 = vld [vmem:[#allocation7 + $0x2e0] sm:$0xff]
    %v403 = vld [vmem:[#allocation7 + $0x2e8] sm:$0xff]
    %v404 = vld [vmem:[#allocation7 + $0x2f0] sm:$0xff]
    %v405 = vld [vmem:[#allocation7 + $0x2f8] sm:$0xff]
    %v406 = vld [vmem:[#allocation7 + $0x300] sm:$0xff]
    %v407 = vld [vmem:[#allocation7 + $0x308] sm:$0xff]
    %v408 = vld [vmem:[#allocation7 + $0x310] sm:$0xff]
    %v409 = vld [vmem:[#allocation7 + $0x318] sm:$0xff]
    %v410 = vld [vmem:[#allocation7 + $0x320] sm:$0xff]
    %v411 = vld [vmem:[#allocation7 + $0x328] sm:$0xff]
    %v412 = vld [vmem:[#allocation7 + $0x330] sm:$0xff]
    %v413 = vld [vmem:[#allocation7 + $0x338] sm:$0xff]
    %v414 = vld [vmem:[#allocation7 + $0x340] sm:$0xff]
    %v415 = vld [vmem:[#allocation7 + $0x348] sm:$0xff]
    %v416 = vld [vmem:[#allocation7 + $0x350] sm:$0xff]
    %v417 = vld [vmem:[#allocation7 + $0x358] sm:$0xff]
    %v418 = vld [vmem:[#allocation7 + $0x360] sm:$0xff]
    %v419 = vld [vmem:[#allocation7 + $0x368] sm:$0xff]
    %v420 = vld [vmem:[#allocation7 + $0x370] sm:$0xff]
    %v421 = vld [vmem:[#allocation7 + $0x378] sm:$0xff]
    %v422 = vld [vmem:[#allocation7 + $0x380] sm:$0xff]
    %v423 = vld [vmem:[#allocation7 + $0x388] sm:$0xff]
    %v424 = vld [vmem:[#allocation7 + $0x390] sm:$0xff]
    %v425 = vld [vmem:[#allocation7 + $0x398] sm:$0xff]
    %v426 = vld [vmem:[#allocation7 + $0x3a0] sm:$0xff]
    %v427 = vld [vmem:[#allocation7 + $0x3a8] sm:$0xff]
    %v428 = vld [vmem:[#allocation7 + $0x3b0] sm:$0xff]
    %v429 = vld [vmem:[#allocation7 + $0x3b8] sm:$0xff]
    %v430 = vld [vmem:[#allocation7 + $0x3c0] sm:$0xff]
    %v431 = vld [vmem:[#allocation7 + $0x3c8] sm:$0xff]
    %v432 = vld [vmem:[#allocation7 + $0x3d0] sm:$0xff]
    %v433 = vld [vmem:[#allocation7 + $0x3d8] sm:$0xff]
    %v434 = vld [vmem:[#allocation7 + $0x3e0] sm:$0xff]
    %v435 = vld [vmem:[#allocation7 + $0x3e8] sm:$0xff]
    %v436 = vld [vmem:[#allocation7 + $0x3f0] sm:$0xff]
    %v437 = vld [vmem:[#allocation7 + $0x3f8] sm:$0xff]
    %v438 = vld [vmem:[%s4] sm:$0x3]
    %v440 = vlaneseq
    %v441 = vshrl.u32 %v440, 7
    %v442 = vsub.s32 0, %v441
    %v443 = vrot.slane %v438, %v442
    %v444 = vlaneseq
    %v445 = vshrl.u32 %v444, 7
    %v446 = vsub.s32 1, %v445
    %v447 = vrot.slane %v438, %v446
    %450 = vmatprep.subr.mxu0 %v311
    %451 = vmatpush1.msra.mxu0 %v310
    %452 = vmatprep.subr.mxu0 %v313
    %453 = vmatpush1.msra.mxu0 %v312
    %454 = vmatprep.subr.mxu0 %v315
    %455 = vmatpush1.msra.mxu0 %v314
    %456 = vmatprep.subr.mxu0 %v317
    %457 = vmatpush1.msra.mxu0 %v316
    %458 = vmatprep.subr.mxu0 %v319
    %459 = vmatpush1.msra.mxu0 %v318
    %460 = vmatprep.subr.mxu0 %v321
    %461 = vmatpush1.msra.mxu0 %v320
    %462 = vmatprep.subr.mxu0 %v323
    %463 = vmatpush1.msra.mxu0 %v322
    %464 = vmatprep.subr.mxu0 %v325
    %465 = vmatpush1.msra.mxu0 %v324
    %466 = vmatprep.subr.mxu0 %v327
    %467 = vmatpush1.msra.mxu0 %v326
    %468 = vmatprep.subr.mxu0 %v329
    %469 = vmatpush1.msra.mxu0 %v328
    %470 = vmatprep.subr.mxu0 %v331
    %471 = vmatpush1.msra.mxu0 %v330
    %472 = vmatprep.subr.mxu0 %v333
    %473 = vmatpush1.msra.mxu0 %v332
    %474 = vmatprep.subr.mxu0 %v335
    %475 = vmatpush1.msra.mxu0 %v334
    %476 = vmatprep.subr.mxu0 %v337
    %477 = vmatpush1.msra.mxu0 %v336
    %478 = vmatprep.subr.mxu0 %v339
    %479 = vmatpush1.msra.mxu0 %v338
    %480 = vmatprep.subr.mxu0 %v341
    %481 = vmatpush1.msra.mxu0 %v340
    %482 = vmatprep.subr.mxu0 %v343
    %483 = vmatpush1.msra.mxu0 %v342
    %484 = vmatprep.subr.mxu0 %v345
    %485 = vmatpush1.msra.mxu0 %v344
    %486 = vmatprep.subr.mxu0 %v347
    %487 = vmatpush1.msra.mxu0 %v346
    %488 = vmatprep.subr.mxu0 %v349
    %489 = vmatpush1.msra.mxu0 %v348
    %490 = vmatprep.subr.mxu0 %v351
    %491 = vmatpush1.msra.mxu0 %v350
    %492 = vmatprep.subr.mxu0 %v353
    %493 = vmatpush1.msra.mxu0 %v352
    %494 = vmatprep.subr.mxu0 %v355
    %495 = vmatpush1.msra.mxu0 %v354
    %496 = vmatprep.subr.mxu0 %v357
    %497 = vmatpush1.msra.mxu0 %v356
    %498 = vmatprep.subr.mxu0 %v359
    %499 = vmatpush1.msra.mxu0 %v358
    %500 = vmatprep.subr.mxu0 %v361
    %501 = vmatpush1.msra.mxu0 %v360
    %502 = vmatprep.subr.mxu0 %v363
    %503 = vmatpush1.msra.mxu0 %v362
    %504 = vmatprep.subr.mxu0 %v365
    %505 = vmatpush1.msra.mxu0 %v364
    %506 = vmatprep.subr.mxu0 %v367
    %507 = vmatpush1.msra.mxu0 %v366
    %508 = vmatprep.subr.mxu0 %v369
    %509 = vmatpush1.msra.mxu0 %v368
    %510 = vmatprep.subr.mxu0 %v371
    %511 = vmatpush1.msra.mxu0 %v370
    %512 = vmatprep.subr.mxu0 %v373
    %513 = vmatpush1.msra.mxu0 %v372
    %514 = vmatprep.mubr.f32.mxu0 %v303
    %515 = vmatmul.mubr.f32.gmra.mrb[0].mxu0 %v302
    %v516 = vpop.f32.mrb[0].mxu0
    %v517 = vadd.f32 %v443, %v516
    %v518 = vpop.f32.mrb[0].mxu0
    %v519 = vadd.f32 %v447, %v518
    %520 = vmatprep.mubr.f32.mxu0 %v307
    %521 = vmatmul.mubr.f32.gmra.mrb[0].mxu0 %v306
    %v522 = vpop.f32.mrb[0].mxu0
    %v523 = vadd.f32 %v443, %v522
    %v524 = vpop.f32.mrb[0].mxu0
    %v525 = vadd.f32 %v447, %v524
    %526 = vdwg.mxu0
    %527 = vmatprep.subr.mxu0 %v375
    %528 = vmatpush1.msra.mxu0 %v374
    %529 = vmatprep.subr.mxu0 %v377
    %530 = vmatpush1.msra.mxu0 %v376
    %531 = vmatprep.subr.mxu0 %v379
    %532 = vmatpush1.msra.mxu0 %v378
    %533 = vmatprep.subr.mxu0 %v381
    %534 = vmatpush1.msra.mxu0 %v380
    %535 = vmatprep.subr.mxu0 %v383
    %536 = vmatpush1.msra.mxu0 %v382
    %537 = vmatprep.subr.mxu0 %v385
    %538 = vmatpush1.msra.mxu0 %v384
    %539 = vmatprep.subr.mxu0 %v387
    %540 = vmatpush1.msra.mxu0 %v386
    %541 = vmatprep.subr.mxu0 %v389
    %542 = vmatpush1.msra.mxu0 %v388
    %543 = vmatprep.subr.mxu0 %v391
    %544 = vmatpush1.msra.mxu0 %v390
    %545 = vmatprep.subr.mxu0 %v393
    %546 = vmatpush1.msra.mxu0 %v392
    %547 = vmatprep.subr.mxu0 %v395
    %548 = vmatpush1.msra.mxu0 %v394
    %549 = vmatprep.subr.mxu0 %v397
    %550 = vmatpush1.msra.mxu0 %v396
    %551 = vmatprep.subr.mxu0 %v399
    %552 = vmatpush1.msra.mxu0 %v398
    %553 = vmatprep.subr.mxu0 %v401
    %554 = vmatpush1.msra.mxu0 %v400
    %555 = vmatprep.subr.mxu0 %v403
    %556 = vmatpush1.msra.mxu0 %v402
    %557 = vmatprep.subr.mxu0 %v405
    %558 = vmatpush1.msra.mxu0 %v404
    %559 = vmatprep.subr.mxu0 %v407
    %560 = vmatpush1.msra.mxu0 %v406
    %561 = vmatprep.subr.mxu0 %v409
    %562 = vmatpush1.msra.mxu0 %v408
    %563 = vmatprep.subr.mxu0 %v411
    %564 = vmatpush1.msra.mxu0 %v410
    %565 = vmatprep.subr.mxu0 %v413
    %566 = vmatpush1.msra.mxu0 %v412
    %567 = vmatprep.subr.mxu0 %v415
    %568 = vmatpush1.msra.mxu0 %v414
    %569 = vmatprep.subr.mxu0 %v417
    %570 = vmatpush1.msra.mxu0 %v416
    %571 = vmatprep.subr.mxu0 %v419
    %572 = vmatpush1.msra.mxu0 %v418
    %573 = vmatprep.subr.mxu0 %v421
    %574 = vmatpush1.msra.mxu0 %v420
    %575 = vmatprep.subr.mxu0 %v423
    %576 = vmatpush1.msra.mxu0 %v422
    %577 = vmatprep.subr.mxu0 %v425
    %578 = vmatpush1.msra.mxu0 %v424
    %579 = vmatprep.subr.mxu0 %v427
    %580 = vmatpush1.msra.mxu0 %v426
    %581 = vmatprep.subr.mxu0 %v429
    %582 = vmatpush1.msra.mxu0 %v428
    %583 = vmatprep.subr.mxu0 %v431
    %584 = vmatpush1.msra.mxu0 %v430
    %585 = vmatprep.subr.mxu0 %v433
    %586 = vmatpush1.msra.mxu0 %v432
    %587 = vmatprep.subr.mxu0 %v435
    %588 = vmatpush1.msra.mxu0 %v434
    %589 = vmatprep.subr.mxu0 %v437
    %590 = vmatpush1.msra.mxu0 %v436
    %591 = vmatprep.mubr.f32.mxu0 %v305
    %592 = vmatmul.mubr.f32.gmra.mrb[0].mxu0 %v304
    %v593 = vpop.f32.mrb[0].mxu0
    %v594 = vadd.f32 %v517, %v593
    %v595 = vpop.f32.mrb[0].mxu0
    %v596 = vadd.f32 %v519, %v595
    %597 = vmatprep.mubr.f32.mxu0 %v309
    %598 = vmatmul.mubr.f32.gmra.mrb[0].mxu0 %v308
    %v599 = vpop.f32.mrb[0].mxu0
    %v600 = vadd.f32 %v523, %v599
    %v601 = vpop.f32.mrb[0].mxu0
    %v602 = vadd.f32 %v525, %v601
    %603 = vdwg.mxu0
    %vm604 = vcmp.gt.f32.partialorder %v594, 0.0
    %vm605 = vcmp.gt.f32.partialorder %v596, 0.0
    %vm606 = vcmp.gt.f32.partialorder %v600, 0.0
    %vm607 = vcmp.gt.f32.partialorder %v602, 0.0
    %v608 = vmul.f32 %v594, 0.02
    %v609 = vmul.f32 %v596, 0.02
    %v610 = vmul.f32 %v600, 0.02
    %v611 = vmul.f32 %v602, 0.02
    %v612 = vsel %vm604, %v594, %v608
    %v613 = vsel %vm605, %v596, %v609
    %v614 = vsel %vm606, %v600, %v610
    %v615 = vsel %vm607, %v602, %v611
    %v616 = vld [vmem:[%s5] sm:$0x3]
    %v618 = vlaneseq
    %v619 = vshrl.u32 %v618, 7
    %v620 = vsub.s32 0, %v619
    %v621 = vrot.slane %v616, %v620
    %v622 = vlaneseq
    %v623 = vshrl.u32 %v622, 7
    %v624 = vsub.s32 1, %v623
    %v625 = vrot.slane %v616, %v624
    %v628 = vmul.f32 %v612, %v621
    %v629 = vmul.f32 %v613, %v625
    %v630 = vmul.f32 %v614, %v621
    %v631 = vmul.f32 %v615, %v625
    %v632 = vadd.f32 %v628, %v629
    %633 = vadd.xlane.f32.xlu0 %v632
    %v634 = vpop.xlane.xlu0 %633
    %v635 = vadd.f32 %v630, %v631
    %636 = vadd.xlane.f32.xlu0 %v635
    %v637 = vpop.xlane.xlu0 %636
    %v638 = vld [vmem:[#allocation2] sm:$0x1]
    %v640 = vlaneseq
    %v641 = vshrl.u32 %v640, 7
    %v642 = vsub.s32 0, %v641
    %v643 = vrot.slane %v638, %v642
    %v645 = vadd.f32 %v634, %v643
    %v646 = vadd.f32 %v637, %v643
    %v647 = vsub.f32 0.0, %v645
    %v648 = vsub.f32 0.0, %v646
    %v649 = vmul.f32 %v647, 1.442695
    %v650 = vpow.pop %v649
    %v651 = vmul.f32 %v648, 1.442695
    %v652 = vpow.pop %v651
    %v653 = vadd.f32 %v650, 1.0
    %v654 = vadd.f32 %v652, 1.0
    %v655 = vrcp.pop %v653
    %v656 = vmul.f32 1.0, %v655
    %v657 = vrcp.pop %v654
    %v658 = vmul.f32 1.0, %v657
    %vm659 = vcmask 7168
    %660 = vst.msk [vmem:[%s7] sm:$0xff] %vm659, %v656
    %661 = vst.msk [vmem:[%s7 + $0x8] sm:$0xff] %vm659, %v658
    // Predicated region
    $region42: #{tpu_custom_call.1} parent=1 // pred_check
      _
    $region43: #{tpu_custom_call.1} parent=1 // pred_check_branch
      %663 = sbr.rel (0) target = $region45
    $region44: #{tpu_custom_call.1} parent=1 // pred_region
      _
    $region45: #{tpu_custom_call.1} parent=1 // pred_fallthru
      _
    // Predicated region
    $region46: #{tpu_custom_call.1} parent=1 // pred_check
      _
    $region47: #{tpu_custom_call.1} parent=1 // pred_check_branch
      %665 = sbr.rel (0) target = $region49
    $region48: #{tpu_custom_call.1} parent=1 // pred_region
      _
    $region49: #{tpu_custom_call.1} parent=1 // pred_fallthru
      _
    %666 = vsyncpa [#allocation4], 1
    %667 = vsyncpa [#allocation6], 1

</llo_original>
